<compile_context>
chip_gen: v7x
topology: tpu7x:2x2x1
jax: 0.10.0
libtpu: 0.0.40
codegen_flags: <defaults>
</compile_context>

<pallas_src>
import functools

import jax
import jax.numpy as jnp
import numpy as np
from jax.experimental import pallas as pl
from jax.experimental.pallas import tpu as pltpu


def _phenology_kernel(x_ref, cls_ref, w1_ref, b1_ref, w2_ref, b2_ref,
                      num_ref, den_ref, num_acc, den_acc, *, n_stages):
    # x_ref   : (1, F, T)       feats tile (HW on the lane axis), any float dtype
    # cls_ref : (1, K, T)       class-probability tile
    # w1/b1   : (F, F) bf16 / (F, 1) f32        first 1x1 conv (out, in) + bias
    # w2/b2   : (K*S, F) bf16 / (K*S, 1) f32    classifier conv, STAGE-major rows
    # num_ref : (1, 1, K*S, 1)  partial numerator for this (chunk, batch)
    # den_ref : (1, 1, K, 1)    partial denominator
    # num_acc/den_acc : f32 VMEM scratch persisting across the HW-tile axis
    t = pl.program_id(2)

    @pl.when(t == 0)
    def _():
        num_acc[...] = jnp.zeros_like(num_acc)
        den_acc[...] = jnp.zeros_like(den_acc)

    # Feed bf16 straight into the MXU (native rate on v5e/v6e/v7x); dots
    # accumulate in f32 and all post-dot elementwise math stays f32.
    x = x_ref[0].astype(jnp.bfloat16)                    # (F, T)
    cls = cls_ref[0].astype(jnp.float32)                 # (K, T)

    h = jnp.dot(w1_ref[...], x, preferred_element_type=jnp.float32)
    h = jnp.maximum(h + b1_ref[...], 0.0)                # ReLU, (F, T) f32
    logits = jnp.dot(w2_ref[...], h.astype(jnp.bfloat16),
                     preferred_element_type=jnp.float32)
    p = jax.nn.sigmoid(logits + b2_ref[...])             # (K*S, T) f32, stage-major

    # One tiled multiply + one lane reduction instead of S non-8-aligned
    # sublane slices and S masked column stores into a padded (K, S) scratch.
    cls_t = jnp.tile(cls, (n_stages, 1))                 # (K*S, T), stage-major
    num_acc[...] += jnp.sum(cls_t * p, axis=-1, keepdims=True)
    den_acc[...] += jnp.sum(cls, axis=-1, keepdims=True)

    @pl.when(t == pl.num_programs(2) - 1)
    def _():
        num_ref[0, 0] = num_acc[...]
        den_ref[0, 0] = den_acc[...]


def _vmem_capacity_bytes():
    try:
        return int(pltpu.get_tpu_info().vmem_capacity_bytes)
    except Exception:
        return 64 << 20  # conservative (v7x per-core physical)


def _pick_hw_tile(hw, n_feats, n_classes, n_stages,
                  feats_itemsize, cls_itemsize, vmem_cap):
    """Largest multiple-of-128 lane tile whose *total* kernel VMEM footprint
    (double-buffered input blocks + resident weights + in-kernel f32/bf16
    intermediates) fits a generation-aware budget."""
    F, K, S = n_feats, n_classes, n_stages
    KS = K * S
    budget = min(vmem_cap // 2, 48 << 20)      # <= ~48 MiB even on 128 MiB chips
    # Resident weights/biases (count x2 for buffering) + scratch + out blocks.
    fixed = 2 * (F * F * 2 + F * 4 + KS * F * 2 + KS * 4) + 8 * (KS + K) * 4
    # Per-lane bytes of one HW tile:
    #   feats block (x2 buf) + cls block (x2 buf) + x bf16 + h f32 + h bf16
    #   + logits f32 + p f32 + cls_tiled f32
    per_lane = (2 * F * feats_itemsize + 2 * K * cls_itemsize
                + 2 * F + 4 * F + 2 * F + 3 * 4 * KS)
    avail = max(budget - fixed, per_lane * 128)
    t_max = max(128, (avail // per_lane) // 128 * 128)
    hw_128 = pl.cdiv(hw, 128) * 128
    t = min(t_max, hw_128)
    est = fixed + per_lane * t
    return t, est


def phenology_forward(classes_nchw, feats_nchw, w1, b1, w2, b2,
                      n_classes, n_stages, eps=1e-4):
    """classes: (B,K,H,W), feats: (B,F,H,W); conv params in torch layout
    (w1: (F,F) out/in, b1: (F,), w2: (K*S,F) class-major rows, b2: (K*S,)).
    Returns (B, K, n_stages)."""
    B, F, H, W = feats_nchw.shape
    K, S = n_classes, n_stages
    KS = K * S
    HW = H * W

    # Plain reshape (no transpose, no dtype cast -> no extra HBM pass).
    x = feats_nchw.reshape(B, F, HW)
    cls = classes_nchw.reshape(B, K, HW)

    # bf16 weights feed the MXU at native rate; biases stay f32.
    w1_bf = jnp.asarray(w1).astype(jnp.bfloat16)
    b1_2d = jnp.asarray(b1).astype(jnp.float32).reshape(F, 1)
    # Reorder classifier rows from torch's class-major (k*S + s) to
    # stage-major (s*K + k) so they line up with jnp.tile(cls, (S, 1)).
    perm = np.arange(KS).reshape(K, S).T.reshape(KS)
    w2_bf = jnp.asarray(w2)[perm, :].astype(jnp.bfloat16)
    b2_2d = jnp.asarray(b2)[perm].astype(jnp.float32).reshape(KS, 1)

    vmem_cap = _vmem_capacity_bytes()
    t_hw, est_vmem = _pick_hw_tile(HW, F, K, S,
                                   np.dtype(x.dtype).itemsize,
                                   np.dtype(cls.dtype).itemsize,
                                   vmem_cap)

    n_t = pl.cdiv(HW, t_hw)
    # Megacore coverage on v7x for small batch: split HW tiles into 2 parallel
    # chunks whose partial (num, den) are combined below; single chunk when
    # B >= 2 (batch axis already covers both cores), so no cost elsewhere.
    n_chunks = 2 if (B == 1 and n_t >= 2) else 1
    n_tc = pl.cdiv(n_t, n_chunks)
    hw_pad = n_chunks * n_tc * t_hw
    if hw_pad != HW:
        # Exact: padded pixels have cls == 0 -> contribute 0 to num and den.
        x = jnp.pad(x, ((0, 0), (0, 0), (0, hw_pad - HW)))
        cls = jnp.pad(cls, ((0, 0), (0, 0), (0, hw_pad - HW)))

    kernel = functools.partial(_phenology_kernel, n_stages=S)
    vmem_limit = int(min(vmem_cap * 3 // 4,
                         max(est_vmem + (4 << 20), 32 << 20)))

    num_part, den_part = pl.pallas_call(
        kernel,
        out_shape=(jax.ShapeDtypeStruct((n_chunks, B, KS, 1), jnp.float32),
                   jax.ShapeDtypeStruct((n_chunks, B, K, 1), jnp.float32)),
        grid_spec=pltpu.PrefetchScalarGridSpec(
            num_scalar_prefetch=0,
            grid=(n_chunks, B, n_tc),
            in_specs=[
                # NOTE: if profiling shows exposed DMA at tile boundaries,
                # bump these two to pipeline_mode=pl.Buffered(3) (re-check
                # the VMEM budget on v7x first).
                pl.BlockSpec((1, F, t_hw),
                             lambda c, b, t: (b, 0, c * n_tc + t)),   # feats
                pl.BlockSpec((1, K, t_hw),
                             lambda c, b, t: (b, 0, c * n_tc + t)),   # classes
                pl.BlockSpec((F, F), lambda c, b, t: (0, 0)),         # w1 (bf16)
                pl.BlockSpec((F, 1), lambda c, b, t: (0, 0)),         # b1
                pl.BlockSpec((KS, F), lambda c, b, t: (0, 0)),        # w2 (stage-major bf16)
                pl.BlockSpec((KS, 1), lambda c, b, t: (0, 0)),        # b2
            ],
            out_specs=[
                pl.BlockSpec((1, 1, KS, 1), lambda c, b, t: (c, b, 0, 0)),
                pl.BlockSpec((1, 1, K, 1), lambda c, b, t: (c, b, 0, 0)),
            ],
            scratch_shapes=[pltpu.VMEM((KS, 1), jnp.float32),         # num
                            pltpu.VMEM((K, 1), jnp.float32)],         # den
        ),
        compiler_params=pltpu.CompilerParams(
            dimension_semantics=("parallel", "parallel", "arbitrary"),
            vmem_limit_bytes=vmem_limit),
    )(x, cls, w1_bf, b1_2d, w2_bf, b2_2d)

    # Tiny epilogue combine in XLA (stage-major rows -> (B, K, S)).
    num = num_part.sum(axis=0).reshape(B, S, K)
    den = den_part.sum(axis=0).reshape(B, 1, K)
    return jnp.transpose(num / (den + eps), (0, 2, 1))


def phenology_reference(classes_nchw, feats_nchw, w1, b1, w2, b2,
                        n_classes, n_stages, eps=1e-4):
    """Pure-JAX reference mirroring the PyTorch forward.

    Mirrors the kernel's precision policy: bf16 MXU operands with f32
    accumulation, f32 elementwise math (the only deviation from a pure-f32
    torch forward)."""
    B, F, H, W = feats_nchw.shape
    HW = H * W
    x = feats_nchw.reshape(B, F, HW)
    h = jnp.einsum('of,bfn->bon', w1.astype(jnp.bfloat16),
                   x.astype(jnp.bfloat16),
                   preferred_element_type=jnp.float32)
    h = jnp.maximum(h + b1[None, :, None].astype(jnp.float32), 0.0)
    logits = jnp.einsum('cf,bfn->bcn', w2.astype(jnp.bfloat16),
                        h.astype(jnp.bfloat16),
                        preferred_element_type=jnp.float32)
    logits = logits + b2[None, :, None].astype(jnp.float32)
    pheno = jax.nn.sigmoid(logits).reshape(B, n_classes, n_stages, HW)
    cls = classes_nchw.reshape(B, n_classes, 1, HW).astype(jnp.float32)
    num = jnp.sum(cls * pheno, axis=-1)                   # (B, K, S)
    den = jnp.sum(cls, axis=-1) + eps                     # (B, K, 1)
    return num / den


if __name__ == "__main__":
    B, F, H, W = 2, 32, 16, 16
    n_classes, n_stages = 4, 2   # pheno_model='fs' -> 2 stages

    key = jax.random.PRNGKey(0)
    k_feat, k_cls, k_w1, k_b1, k_w2, k_b2 = jax.random.split(key, 6)

    feats = jax.random.normal(k_feat, (B, F, H, W), dtype=jnp.float32)
    classes = jax.nn.sigmoid(
        jax.random.normal(k_cls, (B, n_classes, H, W), dtype=jnp.float32))

    # 1x1 conv parameters in torch layout: weight (out, in), bias (out,).
    w1 = jax.random.normal(k_w1, (F, F), dtype=jnp.float32) * 0.1
    b1 = jax.random.normal(k_b1, (F,), dtype=jnp.float32) * 0.1
    w2 = jax.random.normal(k_w2, (n_classes * n_stages, F), dtype=jnp.float32) * 0.1
    b2 = jax.random.normal(k_b2, (n_classes * n_stages,), dtype=jnp.float32) * 0.1

    out = phenology_forward(classes, feats, w1, b1, w2, b2,
                            n_classes, n_stages)
    out = jax.block_until_ready(out)

    ref = phenology_reference(classes, feats, w1, b1, w2, b2,
                              n_classes, n_stages)
    np.testing.assert_allclose(np.asarray(out), np.asarray(ref),
                               rtol=2e-3, atol=2e-3)

    assert out.shape == (B, n_classes, n_stages)
    print("KERNEL_OK")
</pallas_src>

<mosaic_0001>
module attributes {stable_mosaic.version = 11 : i64} {
  func.func @_phenology_kernel(%arg0: i32, %arg1: i32, %arg2: i32, %arg3: memref<1x32x256xf32, #tpu.memory_space<vmem>>, %arg4: memref<1x4x256xf32, #tpu.memory_space<vmem>>, %arg5: memref<32x32xbf16, #tpu.memory_space<vmem>>, %arg6: memref<32x1xf32, #tpu.memory_space<vmem>>, %arg7: memref<8x32xbf16, #tpu.memory_space<vmem>>, %arg8: memref<8x1xf32, #tpu.memory_space<vmem>>, %arg9: memref<1x1x8x1xf32, #tpu.memory_space<vmem>>, %arg10: memref<1x1x4x1xf32, #tpu.memory_space<vmem>>, %arg11: memref<8x1xf32, #tpu.memory_space<vmem>>, %arg12: memref<4x1xf32, #tpu.memory_space<vmem>>) attributes {dimension_semantics = [#tpu.dimension_semantics<parallel>, #tpu.dimension_semantics<parallel>, #tpu.dimension_semantics<arbitrary>], iteration_bounds = array<i64: 1, 2, 1>, scalar_prefetch = 0 : i64, scratch_operands = 2 : i64, tpu.core_type = #tpu.core_type<tc>, window_params = [{transform_indices = @transform_0, window_bounds = array<i64: 1, 32, 256>}, {transform_indices = @transform_1, window_bounds = array<i64: 1, 4, 256>}, {pipeline_mode = #tpu.pipeline_mode<synchronous>, transform_indices = @transform_2, window_bounds = array<i64: 32, 32>}, {pipeline_mode = #tpu.pipeline_mode<synchronous>, transform_indices = @transform_3, window_bounds = array<i64: 32, 1>}, {pipeline_mode = #tpu.pipeline_mode<synchronous>, transform_indices = @transform_4, window_bounds = array<i64: 8, 32>}, {pipeline_mode = #tpu.pipeline_mode<synchronous>, transform_indices = @transform_5, window_bounds = array<i64: 8, 1>}, {transform_indices = @transform_6, window_bounds = array<i64: 1, 1, 8, 1>}, {transform_indices = @transform_7, window_bounds = array<i64: 1, 1, 4, 1>}]} {
    %c0_i32 = arith.constant 0 : i32
    %0 = arith.cmpi eq, %arg2, %c0_i32 : i32
    %1 = arith.extui %0 : i1 to i32
    %c0_i32_0 = arith.constant 0 : i32
    %2 = arith.cmpi ne, %1, %c0_i32_0 : i32
    scf.if %2 {
      %cst_29 = arith.constant 0.000000e+00 : f32
      %41 = vector.broadcast %cst_29 : f32 to vector<8x1xf32>
      %c0_30 = arith.constant 0 : index
      %c0_31 = arith.constant 0 : index
      %42 = vector.load %arg11[%c0_30, %c0_31] : memref<8x1xf32, #tpu.memory_space<vmem>>, vector<8x1xf32>
      tpu.vector_store %arg11[%c0_30, %c0_31], %41 {strides = array<i32>} : memref<8x1xf32, #tpu.memory_space<vmem>>, vector<8x1xf32>,
      %cst_32 = arith.constant 0.000000e+00 : f32
      %43 = vector.broadcast %cst_32 : f32 to vector<4x1xf32>
      %c0_33 = arith.constant 0 : index
      %c0_34 = arith.constant 0 : index
      %44 = vector.load %arg12[%c0_33, %c0_34] : memref<4x1xf32, #tpu.memory_space<vmem>>, vector<4x1xf32>
      tpu.vector_store %arg12[%c0_33, %c0_34], %43 {strides = array<i32>} : memref<4x1xf32, #tpu.memory_space<vmem>>, vector<4x1xf32>,
    } else {
    }
    %c0 = arith.constant 0 : index
    %c0_1 = arith.constant 0 : index
    %c0_2 = arith.constant 0 : index
    %3 = vector.load %arg3[%c0, %c0_1, %c0_2] : memref<1x32x256xf32, #tpu.memory_space<vmem>>, vector<1x32x256xf32>
    %4 = vector.shape_cast %3 : vector<1x32x256xf32> to vector<32x256xf32>
    %5 = arith.truncf %4 : vector<32x256xf32> to vector<32x256xbf16>
    %c0_3 = arith.constant 0 : index
    %c0_4 = arith.constant 0 : index
    %c0_5 = arith.constant 0 : index
    %6 = vector.load %arg4[%c0_3, %c0_4, %c0_5] : memref<1x4x256xf32, #tpu.memory_space<vmem>>, vector<1x4x256xf32>
    %7 = vector.shape_cast %6 : vector<1x4x256xf32> to vector<4x256xf32>
    %c0_6 = arith.constant 0 : index
    %c0_7 = arith.constant 0 : index
    %8 = vector.load %arg5[%c0_6, %c0_7] : memref<32x32xbf16, #tpu.memory_space<vmem>>, vector<32x32xbf16>
    %cst = arith.constant dense<0.000000e+00> : vector<32x256xf32>
    %9 = tpu.matmul %8, %5, %cst {dimension_numbers = #tpu.dot_dimension_numbers<[1], [0], [0], [1], [0, 0, 1, 1], [], []>} : vector<32x32xbf16>, vector<32x256xbf16>, vector<32x256xf32> -> vector<32x256xf32>
    %c0_8 = arith.constant 0 : index
    %c0_9 = arith.constant 0 : index
    %10 = vector.load %arg6[%c0_8, %c0_9] : memref<32x1xf32, #tpu.memory_space<vmem>>, vector<32x1xf32>
    %11 = vector.broadcast %10 : vector<32x1xf32> to vector<32x256xf32>
    %12 = arith.addf %9, %11 : vector<32x256xf32>
    %cst_10 = arith.constant 0.000000e+00 : f32
    %13 = vector.broadcast %cst_10 : f32 to vector<32x256xf32>
    %14 = arith.maximumf %12, %13 : vector<32x256xf32>
    %c0_11 = arith.constant 0 : index
    %c0_12 = arith.constant 0 : index
    %15 = vector.load %arg7[%c0_11, %c0_12] : memref<8x32xbf16, #tpu.memory_space<vmem>>, vector<8x32xbf16>
    %16 = arith.truncf %14 : vector<32x256xf32> to vector<32x256xbf16>
    %cst_13 = arith.constant dense<0.000000e+00> : vector<8x256xf32>
    %17 = tpu.matmul %15, %16, %cst_13 {dimension_numbers = #tpu.dot_dimension_numbers<[1], [0], [0], [1], [0, 0, 1, 1], [], []>} : vector<8x32xbf16>, vector<32x256xbf16>, vector<8x256xf32> -> vector<8x256xf32>
    %c0_14 = arith.constant 0 : index
    %c0_15 = arith.constant 0 : index
    %18 = vector.load %arg8[%c0_14, %c0_15] : memref<8x1xf32, #tpu.memory_space<vmem>>, vector<8x1xf32>
    %19 = vector.broadcast %18 : vector<8x1xf32> to vector<8x256xf32>
    %20 = arith.addf %17, %19 : vector<8x256xf32>
    %21 = arith.negf %20 : vector<8x256xf32>
    %22 = math.exp %21 : vector<8x256xf32>
    %cst_16 = arith.constant 1.000000e+00 : f32
    %23 = vector.broadcast %cst_16 : f32 to vector<8x256xf32>
    %24 = arith.addf %23, %22 : vector<8x256xf32>
    %25 = arith.divf %23, %24 : vector<8x256xf32>
    %26 = tpu.concatenate %7, %7 in 0 : vector<4x256xf32>, vector<4x256xf32> -> vector<8x256xf32>
    %c0_17 = arith.constant 0 : index
    %c0_18 = arith.constant 0 : index
    %27 = vector.load %arg11[%c0_17, %c0_18] : memref<8x1xf32, #tpu.memory_space<vmem>>, vector<8x1xf32>
    %28 = arith.mulf %26, %25 : vector<8x256xf32>
    %cst_19 = arith.constant dense<0.000000e+00> : vector<8xf32>
    %29 = vector.multi_reduction <add>, %28, %cst_19 [1] : vector<8x256xf32> to vector<8xf32>
    %30 = vector.shape_cast %29 : vector<8xf32> to vector<8x1xf32>
    %31 = arith.addf %27, %30 : vector<8x1xf32>
    %c0_20 = arith.constant 0 : index
    %c0_21 = arith.constant 0 : index
    %32 = vector.load %arg11[%c0_20, %c0_21] : memref<8x1xf32, #tpu.memory_space<vmem>>, vector<8x1xf32>
    tpu.vector_store %arg11[%c0_20, %c0_21], %31 {strides = array<i32>} : memref<8x1xf32, #tpu.memory_space<vmem>>, vector<8x1xf32>,
    %c0_22 = arith.constant 0 : index
    %c0_23 = arith.constant 0 : index
    %33 = vector.load %arg12[%c0_22, %c0_23] : memref<4x1xf32, #tpu.memory_space<vmem>>, vector<4x1xf32>
    %cst_24 = arith.constant dense<0.000000e+00> : vector<4xf32>
    %34 = vector.multi_reduction <add>, %7, %cst_24 [1] : vector<4x256xf32> to vector<4xf32>
    %35 = vector.shape_cast %34 : vector<4xf32> to vector<4x1xf32>
    %36 = arith.addf %33, %35 : vector<4x1xf32>
    %c0_25 = arith.constant 0 : index
    %c0_26 = arith.constant 0 : index
    %37 = vector.load %arg12[%c0_25, %c0_26] : memref<4x1xf32, #tpu.memory_space<vmem>>, vector<4x1xf32>
    tpu.vector_store %arg12[%c0_25, %c0_26], %36 {strides = array<i32>} : memref<4x1xf32, #tpu.memory_space<vmem>>, vector<4x1xf32>,
    %c0_i32_27 = arith.constant 0 : i32
    %38 = arith.cmpi eq, %arg2, %c0_i32_27 : i32
    %39 = arith.extui %38 : i1 to i32
    %c0_i32_28 = arith.constant 0 : i32
    %40 = arith.cmpi ne, %39, %c0_i32_28 : i32
    scf.if %40 {
      %c0_29 = arith.constant 0 : index
      %c0_30 = arith.constant 0 : index
      %41 = vector.load %arg11[%c0_29, %c0_30] : memref<8x1xf32, #tpu.memory_space<vmem>>, vector<8x1xf32>
      %c0_31 = arith.constant 0 : index
      %c0_32 = arith.constant 0 : index
      %c0_33 = arith.constant 0 : index
      %c0_34 = arith.constant 0 : index
      %42 = vector.load %arg9[%c0_31, %c0_32, %c0_33, %c0_34] : memref<1x1x8x1xf32, #tpu.memory_space<vmem>>, vector<1x1x8x1xf32>
      %43 = vector.shape_cast %42 : vector<1x1x8x1xf32> to vector<8x1xf32>
      %44 = vector.shape_cast %41 : vector<8x1xf32> to vector<1x1x8x1xf32>
      tpu.vector_store %arg9[%c0_31, %c0_32, %c0_33, %c0_34], %44 {strides = array<i32>} : memref<1x1x8x1xf32, #tpu.memory_space<vmem>>, vector<1x1x8x1xf32>,
      %c0_35 = arith.constant 0 : index
      %c0_36 = arith.constant 0 : index
      %45 = vector.load %arg12[%c0_35, %c0_36] : memref<4x1xf32, #tpu.memory_space<vmem>>, vector<4x1xf32>
      %c0_37 = arith.constant 0 : index
      %c0_38 = arith.constant 0 : index
      %c0_39 = arith.constant 0 : index
      %c0_40 = arith.constant 0 : index
      %46 = vector.load %arg10[%c0_37, %c0_38, %c0_39, %c0_40] : memref<1x1x4x1xf32, #tpu.memory_space<vmem>>, vector<1x1x4x1xf32>
      %47 = vector.shape_cast %46 : vector<1x1x4x1xf32> to vector<4x1xf32>
      %48 = vector.shape_cast %45 : vector<4x1xf32> to vector<1x1x4x1xf32>
      tpu.vector_store %arg10[%c0_37, %c0_38, %c0_39, %c0_40], %48 {strides = array<i32>} : memref<1x1x4x1xf32, #tpu.memory_space<vmem>>, vector<1x1x4x1xf32>,
    } else {
    }
    return
  }
  func.func @transform_0(%arg0: i32, %arg1: i32, %arg2: i32) -> (i32, i32, i32) {
    %c1_i32 = arith.constant 1 : i32
    %0 = arith.muli %arg0, %c1_i32 : i32
    %1 = arith.addi %0, %arg2 : i32
    %c0_i32 = arith.constant 0 : i32
    %c0_i32_0 = arith.constant 0 : i32
    return %arg1, %c0_i32, %1 : i32, i32, i32
  }
  func.func @transform_1(%arg0: i32, %arg1: i32, %arg2: i32) -> (i32, i32, i32) {
    %c1_i32 = arith.constant 1 : i32
    %0 = arith.muli %arg0, %c1_i32 : i32
    %1 = arith.addi %0, %arg2 : i32
    %c0_i32 = arith.constant 0 : i32
    %c0_i32_0 = arith.constant 0 : i32
    return %arg1, %c0_i32, %1 : i32, i32, i32
  }
  func.func @transform_2(%arg0: i32, %arg1: i32, %arg2: i32) -> (i32, i32) {
    %c0_i32 = arith.constant 0 : i32
    %c0_i32_0 = arith.constant 0 : i32
    %c0_i32_1 = arith.constant 0 : i32
    return %c0_i32, %c0_i32_0 : i32, i32
  }
  func.func @transform_3(%arg0: i32, %arg1: i32, %arg2: i32) -> (i32, i32) {
    %c0_i32 = arith.constant 0 : i32
    %c0_i32_0 = arith.constant 0 : i32
    %c0_i32_1 = arith.constant 0 : i32
    return %c0_i32, %c0_i32_0 : i32, i32
  }
  func.func @transform_4(%arg0: i32, %arg1: i32, %arg2: i32) -> (i32, i32) {
    %c0_i32 = arith.constant 0 : i32
    %c0_i32_0 = arith.constant 0 : i32
    %c0_i32_1 = arith.constant 0 : i32
    return %c0_i32, %c0_i32_0 : i32, i32
  }
  func.func @transform_5(%arg0: i32, %arg1: i32, %arg2: i32) -> (i32, i32) {
    %c0_i32 = arith.constant 0 : i32
    %c0_i32_0 = arith.constant 0 : i32
    %c0_i32_1 = arith.constant 0 : i32
    return %c0_i32, %c0_i32_0 : i32, i32
  }
  func.func @transform_6(%arg0: i32, %arg1: i32, %arg2: i32) -> (i32, i32, i32, i32) {
    %c0_i32 = arith.constant 0 : i32
    %c0_i32_0 = arith.constant 0 : i32
    %c0_i32_1 = arith.constant 0 : i32
    return %arg0, %arg1, %c0_i32, %c0_i32_0 : i32, i32, i32, i32
  }
  func.func @transform_7(%arg0: i32, %arg1: i32, %arg2: i32) -> (i32, i32, i32, i32) {
    %c0_i32 = arith.constant 0 : i32
    %c0_i32_0 = arith.constant 0 : i32
    %c0_i32_1 = arith.constant 0 : i32
    return %arg0, %arg1, %c0_i32, %c0_i32_0 : i32, i32, i32, i32
  }
}

</mosaic_0001>

<llo_original>
// kernel: tpu_custom_call.1
$region0: #{tpu_custom_call.1}
  #allocation0 [shape = 'u32[]', space=smem, size = 0x4, offset = 0x4, fixed_abs, tag = 'smem constant byte address 0x4 - core index']
  #allocation1 [shape = 'u32[144,128]{1,0:T(1,128)}', space=vmem, size = 0x12000, scoped, tag = 'internal scratch']
  #allocation2 [shape = 'f32[8,1]{1,0:T(8,128)}', space=vmem, size = 0x1000, scoped, tag = 'scratch operand']
  #allocation3 [shape = 'f32[4,1]{1,0:T(4,128)}', space=vmem, size = 0x800, scoped, tag = 'scratch operand']
  %s0 = inlined_call_operand.hbm [shape: f32[2,32,256], index: 0, kind: input, shape index: {}]
  %s1 = inlined_call_operand.vmem [shape: f32[2,4,256], index: 1, kind: input, shape index: {}]
  %s2 = inlined_call_operand.vmem [shape: bf16[32,32], index: 2, kind: input, shape index: {}]
  %s3 = inlined_call_operand.vmem [shape: f32[32,1], index: 3, kind: input, shape index: {}]
  %s4 = inlined_call_operand.vmem [shape: bf16[8,32], index: 4, kind: input, shape index: {}]
  %s5 = inlined_call_operand.vmem [shape: f32[8,1], index: 5, kind: input, shape index: {}]
  %s6 = inlined_call_operand.vmem [shape: f32[1,2,8,1], index: 6, kind: output, shape index: {0}]
  %s7 = inlined_call_operand.vmem [shape: f32[1,2,4,1], index: 7, kind: output, shape index: {1}]
  %8 = xla_tuple %s6, %s7
  %s9 = sld [smem:[#allocation0]]
  $region77: #{tpu_custom_call.1} parent=0
    _
  %s11 = ssub.s32 1, %s9
  %s12 = scalar_select 0, %s11, %s9
  $region1: #{tpu_custom_call.1} parent=0
    #allocation4 [shape = 'u8[65536]{0}', space=vmem, size = 0x10000, scoped, tag = 'input window, operand 0']
    #allocation5 [shape = 's32[2]{0}', space=sflag, size = 0x8, scoped, tag = 'scoped memory for tpu_custom_call.1']
    %13 = vsyncpa [#allocation5], 0
    %s14 = scalar_lea.sflag [#allocation5], 1
    %15 = vsyncpa %s14, 0
    loop: start=0, step=1, limit=4
    $region2: #{tpu_custom_call.1} parent=1 // loop_pre_header
      _
    $region3: #{tpu_custom_call.1} parent=1 // loop_header
      %s17 = sphi 0, %s21
      %p18 = scmp.ge.s32.totalorder %s17, 4
      %s24 = sphi 0, %s43
      %s25 = sphi 0, %s39
      %s26 = sphi 0, %s35
      %s27 = sphi 0, %s24
      %s28 = sphi 0, %s25
      %s29 = sphi 0, %s26
      %s30 = sphi 0, %s27
      %s31 = sphi 0, %s28
      %s32 = sphi 0, %s29
      %s50 = sphi 0, %s52
      %s53 = sphi 0, %s50
      %s54 = sphi 0, %s53
      %s70 = sphi 0, %s54
      %s80 = sphi 0, %s82
      %s83 = sphi 0, %s80
      %s84 = sphi 0, %s83
      %s100 = sphi 0, %s84
      %s104 = sphi 0, %s104
      %s106 = sphi 0, %s104
      %s107 = sphi 0, %s106
      %s121 = sphi 0, %s107
      %s125 = sphi 0, %s125
      %s127 = sphi 0, %s125
      %s128 = sphi 0, %s127
      %s142 = sphi 0, %s128
      %s146 = sphi 0, %s146
      %s148 = sphi 0, %s146
      %s149 = sphi 0, %s148
      %s163 = sphi 0, %s149
      %s167 = sphi 0, %s167
      %s169 = sphi 0, %s167
      %s170 = sphi 0, %s169
      %s184 = sphi 0, %s170
      %s192 = sphi 0, %s194
      %s195 = sphi 0, %s192
      %s196 = sphi 0, %s195
      %s212 = sphi 0, %s196
      %s220 = sphi 0, %s222
      %s223 = sphi 0, %s220
      %s224 = sphi 0, %s223
      %s240 = sphi 0, %s224
    $region4: #{tpu_custom_call.1} parent=1 // loop_header_branch
      %20 = sbr.rel (%p18) target = $region8
    $region5: #{tpu_custom_call.1} parent=1 // loop_body
      %s22 = ssub.s32 %s17, 1
      %s23 = ssub.s32 %s17, 2
      %s33 = sadd.s32 1, %s26
      %p34 = scmp.ge.s32.totalorder %s33, 1
      %s35 = scalar_select %p34, 0, %s33
      %s36 = sadd.s32 1, %s25
      %s37 = scalar_select %p34, %s36, %s25
      %p38 = scmp.ge.s32.totalorder %s37, 2
      %s39 = scalar_select %p38, 0, %s37
      %s40 = sadd.s32 1, %s24
      %s41 = scalar_select %p38, %s40, %s24
      %p42 = scmp.ge.s32.totalorder %s41, 1
      %s43 = scalar_select %p42, 0, %s41
      %s44 = sadd.s32 %s24, %s26
      %s45 = sadd.s32 %s43, %s35
      %s46 = ssub.s32 %s25, %s39
      %s47 = ssub.s32 %s44, %s45
      %s48 = sor.u32 %s46, %s47
      %p49 = scmp.eq.s32.totalorder %s48, 0
      %s51 = sadd.s32 %s50, 1
      %s52 = scalar_select %p49, %s50, %s51
      %p55 = pneg %p49
      %p56 = scmp.eq.s32.totalorder %s17, 1
      %p57 = por %p55, %p56
      %p58 = scmp.ne.s32.totalorder %s50, %s53
      %p59 = scmp.eq.s32.totalorder %s17, 0
      %p60 = por %p58, %p59
      %p61 = scmp.ne.s32.totalorder %s50, %s53
      %p62 = scmp.eq.s32.totalorder %s22, 1
      %p63 = por %p61, %p62
      %p64 = scmp.ne.s32.totalorder %s53, %s54
      %p65 = scmp.eq.s32.totalorder %s22, 0
      %p66 = por %p64, %p65
      %p67 = scmp.ne.s32.totalorder %s53, %s54
      %p68 = scmp.eq.s32.totalorder %s23, 1
      %p69 = por %p67, %p68
      %p71 = scmp.ne.s32.totalorder %s54, %s70
      %p72 = scmp.eq.s32.totalorder %s23, 0
      %p73 = por %p71, %p72
      %s74 = sadd.s32 %s24, %s26
      %s75 = sadd.s32 %s43, %s35
      %s76 = ssub.s32 %s25, %s39
      %s77 = ssub.s32 %s74, %s75
      %s78 = sor.u32 %s76, %s77
      %p79 = scmp.eq.s32.totalorder %s78, 0
      %s81 = sadd.s32 %s80, 1
      %s82 = scalar_select %p79, %s80, %s81
      %p85 = pneg %p79
      %p86 = scmp.eq.s32.totalorder %s17, 1
      %p87 = por %p85, %p86
      %p88 = scmp.ne.s32.totalorder %s80, %s83
      %p89 = scmp.eq.s32.totalorder %s17, 0
      %p90 = por %p88, %p89
      %p91 = scmp.ne.s32.totalorder %s80, %s83
      %p92 = scmp.eq.s32.totalorder %s22, 1
      %p93 = por %p91, %p92
      %p94 = scmp.ne.s32.totalorder %s83, %s84
      %p95 = scmp.eq.s32.totalorder %s22, 0
      %p96 = por %p94, %p95
      %p97 = scmp.ne.s32.totalorder %s83, %s84
      %p98 = scmp.eq.s32.totalorder %s23, 1
      %p99 = por %p97, %p98
      %p101 = scmp.ne.s32.totalorder %s84, %s100
      %p102 = scmp.eq.s32.totalorder %s23, 0
      %p103 = por %p101, %p102
      %s105 = sadd.s32 %s104, 1
      %p108 = scmp.eq.s32.totalorder %s17, 1
      %p109 = scmp.ne.s32.totalorder %s104, %s106
      %p110 = scmp.eq.s32.totalorder %s17, 0
      %p111 = por %p109, %p110
      %p112 = scmp.ne.s32.totalorder %s104, %s106
      %p113 = scmp.eq.s32.totalorder %s22, 1
      %p114 = por %p112, %p113
      %p115 = scmp.ne.s32.totalorder %s106, %s107
      %p116 = scmp.eq.s32.totalorder %s22, 0
      %p117 = por %p115, %p116
      %p118 = scmp.ne.s32.totalorder %s106, %s107
      %p119 = scmp.eq.s32.totalorder %s23, 1
      %p120 = por %p118, %p119
      %p122 = scmp.ne.s32.totalorder %s107, %s121
      %p123 = scmp.eq.s32.totalorder %s23, 0
      %p124 = por %p122, %p123
      %s126 = sadd.s32 %s125, 1
      %p129 = scmp.eq.s32.totalorder %s17, 1
      %p130 = scmp.ne.s32.totalorder %s125, %s127
      %p131 = scmp.eq.s32.totalorder %s17, 0
      %p132 = por %p130, %p131
      %p133 = scmp.ne.s32.totalorder %s125, %s127
      %p134 = scmp.eq.s32.totalorder %s22, 1
      %p135 = por %p133, %p134
      %p136 = scmp.ne.s32.totalorder %s127, %s128
      %p137 = scmp.eq.s32.totalorder %s22, 0
      %p138 = por %p136, %p137
      %p139 = scmp.ne.s32.totalorder %s127, %s128
      %p140 = scmp.eq.s32.totalorder %s23, 1
      %p141 = por %p139, %p140
      %p143 = scmp.ne.s32.totalorder %s128, %s142
      %p144 = scmp.eq.s32.totalorder %s23, 0
      %p145 = por %p143, %p144
      %s147 = sadd.s32 %s146, 1
      %p150 = scmp.eq.s32.totalorder %s17, 1
      %p151 = scmp.ne.s32.totalorder %s146, %s148
      %p152 = scmp.eq.s32.totalorder %s17, 0
      %p153 = por %p151, %p152
      %p154 = scmp.ne.s32.totalorder %s146, %s148
      %p155 = scmp.eq.s32.totalorder %s22, 1
      %p156 = por %p154, %p155
      %p157 = scmp.ne.s32.totalorder %s148, %s149
      %p158 = scmp.eq.s32.totalorder %s22, 0
      %p159 = por %p157, %p158
      %p160 = scmp.ne.s32.totalorder %s148, %s149
      %p161 = scmp.eq.s32.totalorder %s23, 1
      %p162 = por %p160, %p161
      %p164 = scmp.ne.s32.totalorder %s149, %s163
      %p165 = scmp.eq.s32.totalorder %s23, 0
      %p166 = por %p164, %p165
      %s168 = sadd.s32 %s167, 1
      %p171 = scmp.eq.s32.totalorder %s17, 1
      %p172 = scmp.ne.s32.totalorder %s167, %s169
      %p173 = scmp.eq.s32.totalorder %s17, 0
      %p174 = por %p172, %p173
      %p175 = scmp.ne.s32.totalorder %s167, %s169
      %p176 = scmp.eq.s32.totalorder %s22, 1
      %p177 = por %p175, %p176
      %p178 = scmp.ne.s32.totalorder %s169, %s170
      %p179 = scmp.eq.s32.totalorder %s22, 0
      %p180 = por %p178, %p179
      %p181 = scmp.ne.s32.totalorder %s169, %s170
      %p182 = scmp.eq.s32.totalorder %s23, 1
      %p183 = por %p181, %p182
      %p185 = scmp.ne.s32.totalorder %s170, %s184
      %p186 = scmp.eq.s32.totalorder %s23, 0
      %p187 = por %p185, %p186
      %s188 = ssub.s32 %s24, %s43
      %s189 = ssub.s32 %s25, %s39
      %s190 = sor.u32 %s188, %s189
      %p191 = scmp.eq.s32.totalorder %s190, 0
      %s193 = sadd.s32 %s192, 1
      %s194 = scalar_select %p191, %s192, %s193
      %p197 = pneg %p191
      %p198 = scmp.eq.s32.totalorder %s17, 1
      %p199 = por %p197, %p198
      %p200 = scmp.ne.s32.totalorder %s192, %s195
      %p201 = scmp.eq.s32.totalorder %s17, 0
      %p202 = por %p200, %p201
      %p203 = scmp.ne.s32.totalorder %s192, %s195
      %p204 = scmp.eq.s32.totalorder %s22, 1
      %p205 = por %p203, %p204
      %p206 = scmp.ne.s32.totalorder %s195, %s196
      %p207 = scmp.eq.s32.totalorder %s22, 0
      %p208 = por %p206, %p207
      %p209 = scmp.ne.s32.totalorder %s195, %s196
      %p210 = scmp.eq.s32.totalorder %s23, 1
      %p211 = por %p209, %p210
      %p213 = scmp.ne.s32.totalorder %s196, %s212
      %p214 = scmp.eq.s32.totalorder %s23, 0
      %p215 = por %p213, %p214
      %s216 = ssub.s32 %s24, %s43
      %s217 = ssub.s32 %s25, %s39
      %s218 = sor.u32 %s216, %s217
      %p219 = scmp.eq.s32.totalorder %s218, 0
      %s221 = sadd.s32 %s220, 1
      %s222 = scalar_select %p219, %s220, %s221
      %p225 = pneg %p219
      %p226 = scmp.eq.s32.totalorder %s17, 1
      %p227 = por %p225, %p226
      %p228 = scmp.ne.s32.totalorder %s220, %s223
      %p229 = scmp.eq.s32.totalorder %s17, 0
      %p230 = por %p228, %p229
      %p231 = scmp.ne.s32.totalorder %s220, %s223
      %p232 = scmp.eq.s32.totalorder %s22, 1
      %p233 = por %p231, %p232
      %p234 = scmp.ne.s32.totalorder %s223, %s224
      %p235 = scmp.eq.s32.totalorder %s22, 0
      %p236 = por %p234, %p235
      %p237 = scmp.ne.s32.totalorder %s223, %s224
      %p238 = scmp.eq.s32.totalorder %s23, 1
      %p239 = por %p237, %p238
      %p241 = scmp.ne.s32.totalorder %s224, %s240
      %p242 = scmp.eq.s32.totalorder %s23, 0
      %p243 = por %p241, %p242
      %p244 = scmp.le.s32.totalorder 1, %s17
      %p245 = scmp.lt.s32.totalorder %s17, 3
      %p246 = pnand %p244, %p245
      %p247 = pneg %p246
      // Predicated region
      $region9: #{tpu_custom_call.1} parent=5 // pred_check
        _
      $region10: #{tpu_custom_call.1} parent=5 // pred_check_branch
        %249 = sbr.rel (%p246) target = $region12
      $region11: #{tpu_custom_call.1} parent=5 // pred_region
        %s250 = ssub.s32 %s17, 1
        // Predicated region
        $region13: #{tpu_custom_call.1} parent=11 // pred_check
          %p251 = pneg %p117
        $region14: #{tpu_custom_call.1} parent=11 // pred_check_branch
          %253 = sbr.rel (%p251) target = $region16
        $region15: #{tpu_custom_call.1} parent=11 // pred_region
          _
        $region16: #{tpu_custom_call.1} parent=11 // pred_fallthru
          _
        // Predicated region
        $region17: #{tpu_custom_call.1} parent=11 // pred_check
          %p254 = pneg %p138
        $region18: #{tpu_custom_call.1} parent=11 // pred_check_branch
          %256 = sbr.rel (%p254) target = $region20
        $region19: #{tpu_custom_call.1} parent=11 // pred_region
          _
        $region20: #{tpu_custom_call.1} parent=11 // pred_fallthru
          _
        // Predicated region
        $region21: #{tpu_custom_call.1} parent=11 // pred_check
          %p257 = pneg %p159
        $region22: #{tpu_custom_call.1} parent=11 // pred_check_branch
          %259 = sbr.rel (%p257) target = $region24
        $region23: #{tpu_custom_call.1} parent=11 // pred_region
          _
        $region24: #{tpu_custom_call.1} parent=11 // pred_fallthru
          _
        // Predicated region
        $region25: #{tpu_custom_call.1} parent=11 // pred_check
          %p260 = pneg %p180
        $region26: #{tpu_custom_call.1} parent=11 // pred_check_branch
          %262 = sbr.rel (%p260) target = $region28
        $region27: #{tpu_custom_call.1} parent=11 // pred_region
          _
        $region28: #{tpu_custom_call.1} parent=11 // pred_fallthru
          _
      $region12: #{tpu_custom_call.1} parent=5 // pred_fallthru
        _
      %p263 = scmp.lt.s32.totalorder %s17, 2
      // Predicated region
      $region29: #{tpu_custom_call.1} parent=5 // pred_check
        %p264 = pneg %p263
      $region30: #{tpu_custom_call.1} parent=5 // pred_check_branch
        %266 = sbr.rel (%p264) target = $region32
      $region31: #{tpu_custom_call.1} parent=5 // pred_region
        // Predicated region
        $region33: #{tpu_custom_call.1} parent=31 // pred_check
          %p267 = pneg %p60
        $region34: #{tpu_custom_call.1} parent=31 // pred_check_branch
          %269 = sbr.rel (%p267) target = $region36
        $region35: #{tpu_custom_call.1} parent=31 // pred_region
          %s270 = sand.u32 %s50, 1
          %s271 = scalar_lea.sflag [#allocation5], %s270
          %s272 = sand.u32 %s50, 1
          %s273 = smul.addr %s272, 64
          %s274 = scalar_lea.vmem [#allocation4], %s273
          %s275 = sadd.s32 %s24, %s26
          %s276 = smul.u32 2, %s275
          %s278 = ssub.s32 1024, 1024
          %279 = vsyncadd %s271, %s278
          %s280 = smul.addr %s25, 8
          %s281 = sadd.s32 %s276, %s280
          %s282 = smul.addr %s281, 128
          %s283 = scalar_lea.hbm %s0, %s282
          %s284 = sshll.u32 %s274, 4
          %s285 = int_to_ptr.vmem [resolvable:$true] %s284
          %290 = dma.hbm_to_vmem [thread:$0]  %s283, 1024, %s285, %s271, 256, 256, 16
        $region36: #{tpu_custom_call.1} parent=31 // pred_fallthru
          _
        // Predicated region
        $region37: #{tpu_custom_call.1} parent=31 // pred_check
          %p291 = pneg %p90
        $region38: #{tpu_custom_call.1} parent=31 // pred_check_branch
          %293 = sbr.rel (%p291) target = $region40
        $region39: #{tpu_custom_call.1} parent=31 // pred_region
          %s294 = sadd.s32 %s24, %s26
          %s295 = smul.u32 2, %s294
          %p296 = scmp.lt.s32.totalorder %s25, 1
          %s297 = scalar_select %p296, %s25, 1
          %p298 = scmp.lt.s32.totalorder %s295, 1
          %s299 = scalar_select %p298, %s295, 1
          %s300 = smul.addr %s297, 2
          %s301 = sadd.s32 %s299, %s300
          %s302 = smul.addr %s301, 4
          %s303 = scalar_lea.vmem %s1, %s302
          %s304 = sadd.s32 %s24, %s26
          %s305 = smul.u32 2, %s304
        $region40: #{tpu_custom_call.1} parent=31 // pred_fallthru
          _
      $region32: #{tpu_custom_call.1} parent=5 // pred_fallthru
        _
      %p306 = scmp.le.s32.totalorder 1, %s17
      %p307 = scmp.lt.s32.totalorder %s17, 3
      %p308 = pnand %p306, %p307
      %p309 = pneg %p308
      // Predicated region
      $region41: #{tpu_custom_call.1} parent=5 // pred_check
        _
      $region42: #{tpu_custom_call.1} parent=5 // pred_check_branch
        %311 = sbr.rel (%p308) target = $region44
      $region43: #{tpu_custom_call.1} parent=5 // pred_region
        %s312 = ssub.s32 %s17, 1
        %s313 = sand.u32 %s53, 1
        %s314 = scalar_lea.sflag [#allocation5], %s313
        %s315 = sand.u32 %s53, 1
        %s316 = smul.addr %s315, 64
        %s317 = scalar_lea.vmem [#allocation4], %s316
        // Predicated region
        $region45: #{tpu_custom_call.1} parent=43 // pred_check
          %p318 = pneg %p66
        $region46: #{tpu_custom_call.1} parent=43 // pred_check_branch
          %320 = sbr.rel (%p318) target = $region48
        $region47: #{tpu_custom_call.1} parent=43 // pred_region
          %321 = dma.done %s314, 1024
        $region48: #{tpu_custom_call.1} parent=43 // pred_fallthru
          _
        %s322 = sand.u32 %s53, 1
        %s323 = scalar_lea.sflag [#allocation5], %s322
        %s324 = sand.u32 %s53, 1
        %s325 = smul.addr %s324, 64
        %s326 = scalar_lea.vmem [#allocation4], %s325
        %p327 = pneg %p66
        %p328 = pneg %p63
        %s329 = sadd.s32 %s27, %s29
        %s330 = smul.u32 2, %s329
        %p331 = scmp.lt.s32.totalorder %s28, 1
        %s332 = scalar_select %p331, %s28, 1
        %p333 = scmp.lt.s32.totalorder %s330, 1
        %s334 = scalar_select %p333, %s330, 1
        %s335 = smul.addr %s332, 2
        %s336 = sadd.s32 %s334, %s335
        %s337 = smul.addr %s336, 4
        %s338 = scalar_lea.vmem %s1, %s337
        %p339 = pneg %p96
        %p340 = pneg %p93
        %p341 = pneg %p117
        %p342 = pneg %p114
        %p343 = pneg %p138
        %p344 = pneg %p135
        %p345 = pneg %p159
        %p346 = pneg %p156
        %p347 = pneg %p180
        %p348 = pneg %p177
        %p349 = pneg %p208
        %p350 = pneg %p205
        %p351 = scmp.lt.s32.totalorder %s27, 0
        %s352 = scalar_select %p351, %s27, 0
        %p353 = scmp.lt.s32.totalorder %s28, 1
        %s354 = scalar_select %p353, %s28, 1
        %s355 = smul.addr %s352, 2
        %s356 = sadd.s32 %s354, %s355
        %s357 = smul.addr %s356, 8
        %s358 = scalar_lea.vmem %s6, %s357
        %p359 = pneg %p236
        %p360 = pneg %p233
        %p361 = scmp.lt.s32.totalorder %s27, 0
        %s362 = scalar_select %p361, %s27, 0
        %p363 = scmp.lt.s32.totalorder %s28, 1
        %s364 = scalar_select %p363, %s28, 1
        %s365 = smul.addr %s362, 2
        %s366 = sadd.s32 %s364, %s365
        %s367 = smul.addr %s366, 4
        %s368 = scalar_lea.vmem %s7, %s367
        %s369 = sadd.s32 %s27, %s29
        %s370 = smul.u32 2, %s369
        %s371 = sadd.s32 %s27, %s29
        %s372 = smul.u32 2, %s371
        %p373 = scmp.lt.s32.totalorder %s28, 1
        %s374 = scalar_select %p373, %s28, 1
        %p375 = scmp.lt.s32.totalorder %s372, 1
        %s376 = scalar_select %p375, %s372, 1
        %s377 = smul.addr %s374, 2
        %s378 = sadd.s32 %s376, %s377
        %s379 = smul.addr %s378, 4
        %s380 = scalar_lea.vmem %s1, %s379
        %s381 = sadd.s32 %s27, %s29
        %s382 = smul.u32 2, %s381
        %p383 = scmp.lt.s32.totalorder %s27, 0
        %s384 = scalar_select %p383, %s27, 0
        %p385 = scmp.lt.s32.totalorder %s28, 1
        %s386 = scalar_select %p385, %s28, 1
        %s387 = smul.addr %s384, 2
        %s388 = sadd.s32 %s386, %s387
        %s389 = smul.addr %s388, 8
        %s390 = scalar_lea.vmem %s6, %s389
        %p391 = scmp.lt.s32.totalorder %s27, 0
        %s392 = scalar_select %p391, %s27, 0
        %p393 = scmp.lt.s32.totalorder %s28, 1
        %s394 = scalar_select %p393, %s28, 1
        %s395 = smul.addr %s392, 2
        %s396 = sadd.s32 %s394, %s395
        %s397 = smul.addr %s396, 4
        %s398 = scalar_lea.vmem %s7, %s397
        %p400 = scmp.eq.s32.totalorder %s29, 0
        // Predicated region
        $region49: #{tpu_custom_call.1} parent=43 // pred_check
          %p401 = pneg %p400
        $region50: #{tpu_custom_call.1} parent=43 // pred_check_branch
          %403 = sbr.rel (%p401) target = $region52
        $region51: #{tpu_custom_call.1} parent=43 // pred_region
          %vm404 = vcmask 7168
          %405 = vst.msk [vmem:[#allocation2] sm:$0xff] %vm404, 0.0
          %vm406 = vcmask 3072
          %407 = vst.msk [vmem:[#allocation3] sm:$0xf] %vm406, 0.0
        $region52: #{tpu_custom_call.1} parent=43 // pred_fallthru
          _
        %v408 = vld [vmem:[%s317] sm:$0xff]
        %v409 = vld [vmem:[%s317 + $0x8] sm:$0xff]
        %v410 = vld [vmem:[%s317 + $0x10] sm:$0xff]
        %v411 = vld [vmem:[%s317 + $0x18] sm:$0xff]
        %v412 = vld [vmem:[%s317 + $0x20] sm:$0xff]
        %v413 = vld [vmem:[%s317 + $0x28] sm:$0xff]
        %v414 = vld [vmem:[%s317 + $0x30] sm:$0xff]
        %v415 = vld [vmem:[%s317 + $0x38] sm:$0xff]
        %v416 = vpack.c.bf16 %v410, %v408
        %v417 = vpack.c.bf16 %v411, %v409
        %v418 = vpack.c.bf16 %v414, %v412
        %v419 = vpack.c.bf16 %v415, %v413
        %v420 = vld [vmem:[%s380] sm:$0xff]
        %v421 = vld [vmem:[%s2] sm:$0xf]
        %v422 = vld [vmem:[%s2 + $0x4] sm:$0xf]
        %v423 = vld [vmem:[%s2 + $0x8] sm:$0xf]
        %v424 = vld [vmem:[%s2 + $0xc] sm:$0xf]
        %v425 = vld [vmem:[%s3] sm:$0xff]
        %v426 = vld [vmem:[%s3 + $0x8] sm:$0xff]
        %v427 = vld [vmem:[%s3 + $0x10] sm:$0xff]
        %v428 = vld [vmem:[%s3 + $0x18] sm:$0xff]
        %430 = vset.pattern.permute.xlu0 0
        %431 = vperm.xlu0 %430, %v425
        %v432 = vpop.permute.xlu0 %431
        %435 = vset.pattern.permute.xlu0 0
        %436 = vperm.xlu0 %435, %v426
        %v437 = vpop.permute.xlu0 %436
        %440 = vset.pattern.permute.xlu0 0
        %441 = vperm.xlu0 %440, %v427
        %v442 = vpop.permute.xlu0 %441
        %445 = vset.pattern.permute.xlu0 0
        %446 = vperm.xlu0 %445, %v428
        %v447 = vpop.permute.xlu0 %446
        %v453 = vunpack.c.l.b16 %v421
        %v454 = vunpack.c.l.b16 %v422
        %v455 = vunpack.c.l.b16 %v423
        %v456 = vunpack.c.l.b16 %v424
        %v457 = vpack.c.b16 %v454, %v453
        %v458 = vpack.c.b16 %v456, %v455
        %vm459 = vcmask 261120
        %v461 = vsel %vm459, %v457, 0
        %v464 = vsel %vm459, %v458, 0
        %466 = vmatprep.subr.bf16.mxu0 %v417
        %467 = vmatpush1.bf16.msra.mxu0 %v416
        %468 = vmatprep.subr.bf16.mxu0 %v419
        %469 = vmatpush1.bf16.msra.mxu0 %v418
        %470 = vmatprep.subr.bf16.mxu0 0
        %471 = vmatpush1.bf16.msra.mxu0 0
        %472 = vmatprep.subr.bf16.mxu0 0
        %473 = vmatpush1.bf16.msra.mxu0 0
        %474 = vmatprep.subr.bf16.mxu0 0
        %475 = vmatpush1.bf16.msra.mxu0 0
        %476 = vmatprep.subr.bf16.mxu0 0
        %477 = vmatpush1.bf16.msra.mxu0 0
        %478 = vmatprep.subr.bf16.mxu0 0
        %479 = vmatpush1.bf16.msra.mxu0 0
        %480 = vmatprep.subr.bf16.mxu0 0
        %481 = vmatpush1.bf16.msra.mxu0 0
        %482 = vmatprep.subr.bf16.mxu0 0
        %483 = vmatpush1.bf16.msra.mxu0 0
        %484 = vmatprep.subr.bf16.mxu0 0
        %485 = vmatpush1.bf16.msra.mxu0 0
        %486 = vmatprep.subr.bf16.mxu0 0
        %487 = vmatpush1.bf16.msra.mxu0 0
        %488 = vmatprep.subr.bf16.mxu0 0
        %489 = vmatpush1.bf16.msra.mxu0 0
        %490 = vmatprep.subr.bf16.mxu0 0
        %491 = vmatpush1.bf16.msra.mxu0 0
        %492 = vmatprep.subr.bf16.mxu0 0
        %493 = vmatpush1.bf16.msra.mxu0 0
        %494 = vmatprep.subr.bf16.mxu0 0
        %495 = vmatpush1.bf16.msra.mxu0 0
        %496 = vmatprep.subr.bf16.mxu0 0
        %497 = vmatpush1.bf16.msra.mxu0 0
        %498 = vmatprep.mubr.bf16.mxu0 0
        %499 = vmatmul.mubr.bf16.gmra.mrb[0].mxu0 %v461
        %v500 = vpop.f32.mrb[0].mxu0
        %v501 = vadd.f32 %v432, %v500
        %v502 = vpop.f32.mrb[0].mxu0
        %v503 = vadd.f32 %v432, %v502
        %v504 = vpop.f32.mrb[0].mxu0
        %v505 = vadd.f32 %v437, %v504
        %v506 = vpop.f32.mrb[0].mxu0
        %v507 = vadd.f32 %v437, %v506
        %508 = vmatprep.mubr.bf16.mxu0 0
        %509 = vmatmul.mubr.bf16.gmra.mrb[0].mxu0 %v464
        %v510 = vpop.f32.mrb[0].mxu0
        %v511 = vadd.f32 %v442, %v510
        %v512 = vpop.f32.mrb[0].mxu0
        %v513 = vadd.f32 %v442, %v512
        %v514 = vpop.f32.mrb[0].mxu0
        %v515 = vadd.f32 %v447, %v514
        %v516 = vpop.f32.mrb[0].mxu0
        %v517 = vadd.f32 %v447, %v516
        %518 = vdwg.mxu0
        %v519 = vmax.f32 %v501, 0.0
        %v520 = vmax.f32 %v503, 0.0
        %v521 = vmax.f32 %v505, 0.0
        %v522 = vmax.f32 %v507, 0.0
        %v523 = vmax.f32 %v511, 0.0
        %v524 = vmax.f32 %v513, 0.0
        %v525 = vmax.f32 %v515, 0.0
        %v526 = vmax.f32 %v517, 0.0
        %v527 = vld [vmem:[%s4] sm:$0xf]
        %v528 = vpack.c.bf16 %v521, %v519
        %v529 = vpack.c.bf16 %v522, %v520
        %v530 = vpack.c.bf16 %v525, %v523
        %v531 = vpack.c.bf16 %v526, %v524
        %v532 = vld [vmem:[%s5] sm:$0xff]
        %534 = vset.pattern.permute.xlu0 0
        %535 = vperm.xlu0 %534, %v532
        %v536 = vpop.permute.xlu0 %535
        %v539 = vsel %vm459, %v527, 0
        %541 = vmatprep.subr.bf16.mxu0 %v529
        %542 = vmatpush1.bf16.msra.mxu0 %v528
        %543 = vmatprep.subr.bf16.mxu0 %v531
        %544 = vmatpush1.bf16.msra.mxu0 %v530
        %545 = vmatprep.subr.bf16.mxu0 0
        %546 = vmatpush1.bf16.msra.mxu0 0
        %547 = vmatprep.subr.bf16.mxu0 0
        %548 = vmatpush1.bf16.msra.mxu0 0
        %549 = vmatprep.subr.bf16.mxu0 0
        %550 = vmatpush1.bf16.msra.mxu0 0
        %551 = vmatprep.subr.bf16.mxu0 0
        %552 = vmatpush1.bf16.msra.mxu0 0
        %553 = vmatprep.subr.bf16.mxu0 0
        %554 = vmatpush1.bf16.msra.mxu0 0
        %555 = vmatprep.subr.bf16.mxu0 0
        %556 = vmatpush1.bf16.msra.mxu0 0
        %557 = vmatprep.subr.bf16.mxu0 0
        %558 = vmatpush1.bf16.msra.mxu0 0
        %559 = vmatprep.subr.bf16.mxu0 0
        %560 = vmatpush1.bf16.msra.mxu0 0
        %561 = vmatprep.subr.bf16.mxu0 0
        %562 = vmatpush1.bf16.msra.mxu0 0
        %563 = vmatprep.subr.bf16.mxu0 0
        %564 = vmatpush1.bf16.msra.mxu0 0
        %565 = vmatprep.subr.bf16.mxu0 0
        %566 = vmatpush1.bf16.msra.mxu0 0
        %567 = vmatprep.subr.bf16.mxu0 0
        %568 = vmatpush1.bf16.msra.mxu0 0
        %569 = vmatprep.subr.bf16.mxu0 0
        %570 = vmatpush1.bf16.msra.mxu0 0
        %571 = vmatprep.subr.bf16.mxu0 0
        %572 = vmatpush1.bf16.msra.mxu0 0
        %573 = vmatprep.mubr.bf16.mxu0 0
        %574 = vmatmul.mubr.bf16.gmra.mrb[0].mxu0 %v539
        %v575 = vpop.f32.mrb[0].mxu0
        %v576 = vadd.f32 %v536, %v575
        %v577 = vpop.f32.mrb[0].mxu0
        %v578 = vadd.f32 %v536, %v577
        %v579 = vpop.f32.mrb[0].mxu0
        %v580 = vpop.f32.mrb[0].mxu0
        %581 = vdwg.mxu0
        %v582 = vxor.u32 %v576, 2147483648
        %v583 = vxor.u32 %v578, 2147483648
        %v584 = vmul.f32 %v582, 1.442695
        %v585 = vpow.pop %v584
        %v586 = vmul.f32 %v583, 1.442695
        %v587 = vpow.pop %v586
        %v588 = vadd.f32 %v585, 1.0
        %v589 = vadd.f32 %v587, 1.0
        %v590 = vrcp.pop %v588
        %v591 = vmul.f32 1.0, %v590
        %v592 = vrcp.pop %v589
        %v593 = vmul.f32 1.0, %v592
        %v595 = vcombine.high %v420, %v420
        %v597 = vcombine.low %v420, %v420
        %vm599 = vcmask 1043456
        %v600 = vsel %vm599, %v420, %v597
        %v601 = vsel %vm599, %v595, %v420
        %v602 = vld [vmem:[#allocation2] sm:$0xff]
        %v603 = vmul.f32 %v600, %v591
        %v604 = vmul.f32 %v601, %v593
        %v605 = vadd.f32 %v603, %v604
        %606 = vadd.xlane.f32.xlu0 %v605
        %v607 = vpop.xlane.xlu0 %606
        %v608 = vadd.f32 %v602, %v607
        %vm609 = vcmask 7168
        %610 = vst.msk [vmem:[#allocation2] sm:$0xff] %vm609, %v608
        %v611 = vld [vmem:[#allocation3] sm:$0xf]
        %v612 = vsel %vm599, %v420, 0.0
        %v613 = vsel %vm599, %v595, 0.0
        %v614 = vadd.f32 %v612, %v613
        %615 = vadd.xlane.f32.xlu0 %v614
        %v616 = vpop.xlane.xlu0 %615
        %v617 = vadd.f32 %v611, %v616
        %vm618 = vcmask 3072
        %619 = vst.msk [vmem:[#allocation3] sm:$0xf] %vm618, %v617
        // Predicated region
        $region53: #{tpu_custom_call.1} parent=43 // pred_check
          %p620 = pneg %p400
        $region54: #{tpu_custom_call.1} parent=43 // pred_check_branch
          %622 = sbr.rel (%p620) target = $region56
        $region55: #{tpu_custom_call.1} parent=43 // pred_region
          %v623 = vld [vmem:[#allocation2] sm:$0xff]
          %624 = vst.msk [vmem:[%s390] sm:$0xff] %vm609, %v623
          %v625 = vld [vmem:[#allocation3] sm:$0xf]
          %626 = vst.msk [vmem:[%s398] sm:$0xf] %vm618, %v625
        $region56: #{tpu_custom_call.1} parent=43 // pred_fallthru
          _
        %p627 = scmp.lt.s32.totalorder %s27, 0
        %s628 = scalar_select %p627, %s27, 0
        %p629 = scmp.lt.s32.totalorder %s28, 1
        %s630 = scalar_select %p629, %s28, 1
        %s631 = smul.addr %s628, 2
        %s632 = sadd.s32 %s630, %s631
        %s633 = smul.addr %s632, 8
        %s634 = scalar_lea.vmem %s6, %s633
        %p635 = scmp.lt.s32.totalorder %s27, 0
        %s636 = scalar_select %p635, %s27, 0
        %p637 = scmp.lt.s32.totalorder %s28, 1
        %s638 = scalar_select %p637, %s28, 1
        %s639 = smul.addr %s636, 2
        %s640 = sadd.s32 %s638, %s639
        %s641 = smul.addr %s640, 4
        %s642 = scalar_lea.vmem %s7, %s641
        // Predicated region
        $region57: #{tpu_custom_call.1} parent=43 // pred_check
          %p643 = pneg %p205
        $region58: #{tpu_custom_call.1} parent=43 // pred_check_branch
          %645 = sbr.rel (%p643) target = $region60
        $region59: #{tpu_custom_call.1} parent=43 // pred_region
          _
        $region60: #{tpu_custom_call.1} parent=43 // pred_fallthru
          _
        // Predicated region
        $region61: #{tpu_custom_call.1} parent=43 // pred_check
          %p646 = pneg %p233
        $region62: #{tpu_custom_call.1} parent=43 // pred_check_branch
          %648 = sbr.rel (%p646) target = $region64
        $region63: #{tpu_custom_call.1} parent=43 // pred_region
          _
        $region64: #{tpu_custom_call.1} parent=43 // pred_fallthru
          _
      $region44: #{tpu_custom_call.1} parent=5 // pred_fallthru
        _
      %p649 = scmp.le.s32.totalorder 2, %s17
      // Predicated region
      $region65: #{tpu_custom_call.1} parent=5 // pred_check
        %p650 = pneg %p649
      $region66: #{tpu_custom_call.1} parent=5 // pred_check_branch
        %652 = sbr.rel (%p650) target = $region68
      $region67: #{tpu_custom_call.1} parent=5 // pred_region
        %s653 = ssub.s32 %s17, 2
        // Predicated region
        $region69: #{tpu_custom_call.1} parent=67 // pred_check
          %p654 = pneg %p211
        $region70: #{tpu_custom_call.1} parent=67 // pred_check_branch
          %656 = sbr.rel (%p654) target = $region72
        $region71: #{tpu_custom_call.1} parent=67 // pred_region
          %p657 = scmp.lt.s32.totalorder %s30, 0
          %s658 = scalar_select %p657, %s30, 0
          %p659 = scmp.lt.s32.totalorder %s31, 1
          %s660 = scalar_select %p659, %s31, 1
          %s661 = smul.addr %s658, 2
          %s662 = sadd.s32 %s660, %s661
          %s663 = smul.addr %s662, 8
          %s664 = scalar_lea.vmem %s6, %s663
        $region72: #{tpu_custom_call.1} parent=67 // pred_fallthru
          _
        // Predicated region
        $region73: #{tpu_custom_call.1} parent=67 // pred_check
          %p665 = pneg %p239
        $region74: #{tpu_custom_call.1} parent=67 // pred_check_branch
          %667 = sbr.rel (%p665) target = $region76
        $region75: #{tpu_custom_call.1} parent=67 // pred_region
          %p668 = scmp.lt.s32.totalorder %s30, 0
          %s669 = scalar_select %p668, %s30, 0
          %p670 = scmp.lt.s32.totalorder %s31, 1
          %s671 = scalar_select %p670, %s31, 1
          %s672 = smul.addr %s669, 2
          %s673 = sadd.s32 %s671, %s672
          %s674 = smul.addr %s673, 4
          %s675 = scalar_lea.vmem %s7, %s674
        $region76: #{tpu_custom_call.1} parent=67 // pred_fallthru
          _
      $region68: #{tpu_custom_call.1} parent=5 // pred_fallthru
        _
    $region6: #{tpu_custom_call.1} parent=1 // loop_footer
      %s21 = sadd.s32 1, %s17
    $region7: #{tpu_custom_call.1} parent=1 // loop_footer_branch
      %16 = sbr.rel target = $region3
    $region8: #{tpu_custom_call.1} parent=1 // loop_exit
      _
    %676 = vsyncpa [#allocation5], 1
    %s677 = scalar_lea.sflag [#allocation5], 1
    %678 = vsyncpa %s677, 1

</llo_original>
